<compile_context>
chip_gen: v7x
topology: tpu7x:2x2x1
jax: 0.10.0
libtpu: 0.0.40
codegen_flags: <defaults>
</compile_context>

<pallas_src>
import jax
import jax.numpy as jnp
from jax.experimental import pallas as pl
from jax.experimental.pallas import tpu as pltpu

INPUT_SIZE = 4
HIDDEN_SIZE = 64
OUTPUT_SIZE = 1
LANE = 128  # TPU lane width


def mlp_kernel(xt_ref, w1t_ref, b1_ref, w2t_ref, b2_ref, o_ref):
    # xt_ref  : [IN, TILE_B]   (batch on the lane axis)
    # w1t_ref : [H, IN]        (VMEM-resident, constant across grid)
    # b1_ref  : [H, 1]
    # w2t_ref : [OUT, H]
    # b2_ref  : [1, 1] in SMEM (scalar)
    # o_ref   : [OUT, TILE_B]  (lane-dense output)
    h = jnp.dot(w1t_ref[...], xt_ref[...],
                preferred_element_type=jnp.float32)           # [H, TILE_B] (MXU)
    h = jnp.maximum(h + b1_ref[...], 0.0)                     # bias + ReLU (VPU)
    out = jnp.dot(w2t_ref[...], h,
                  preferred_element_type=jnp.float32)         # [OUT, TILE_B]
    o_ref[...] = (out + b2_ref[0, 0]).astype(o_ref.dtype)


def _pick_tile_b(batch, tile_b):
    """Lane-multiple batch tile bounded by VMEM budget and megacore split."""
    b_lanes = pl.cdiv(batch, LANE) * LANE
    tile_b = max(LANE, (int(tile_b) // LANE) * LANE)
    tile_b = min(tile_b, b_lanes)

    # VMEM budget: the (IN, tile) input block and the (OUT, tile) output block
    # each pad up to 8 sublanes -> 8*tile*4 B per buffer; double-buffered total
    # ~= 128*tile bytes.  Keep it under ~40% of per-core VMEM (v7x: 64 MiB/TC).
    try:
        vmem_cap = pltpu.get_tpu_info().vmem_capacity_bytes
    except Exception:
        vmem_cap = 64 * 1024 * 1024  # conservative (v7x per-core) fallback
    tile_cap = ((int(0.4 * vmem_cap) // 128) // LANE) * LANE
    tile_b = min(tile_b, max(LANE, tile_cap))

    # Give the "parallel" batch axis >= 2 grid steps when the batch allows, so
    # both of v7x's TensorCores get work and the pipeline is actually exercised.
    if b_lanes >= 2 * LANE:
        tile_b = min(tile_b, max(LANE, ((b_lanes // 2) // LANE) * LANE))
    return tile_b


def neural_net_forward(x, w1, b1, w2, b2, *, tile_b=65536, use_bf16=False,
                       x_transposed=False):
    """Forward pass of NeuralNet.

    x : [B, IN] float32 (or [IN, B] if x_transposed=True, which skips the
        input relayout entirely for upstream producers in that layout).
    w1: [IN, H]  b1: [H]  w2: [H, OUT]  b2: [OUT]
    returns [B, OUT] float32.
    """
    xt = x if x_transposed else x.T                    # [IN, B]
    assert xt.shape[0] == INPUT_SIZE
    B = xt.shape[1]

    tile_b = _pick_tile_b(B, tile_b)
    grid = (pl.cdiv(B, tile_b),)

    # Tiny, one-time layout plumbing for the (VMEM-resident) weights.
    w1t = w1.T                                         # [H, IN]
    b1c = b1.reshape(HIDDEN_SIZE, 1).astype(jnp.float32)
    w2t = w2.T.astype(jnp.float32)                     # [OUT, H]
    b2s = b2.reshape(1, 1).astype(jnp.float32)         # [1, 1] -> SMEM scalar

    if use_bf16:
        # Halves x's HBM traffic (the dominant term); dots still accumulate f32.
        xt = xt.astype(jnp.bfloat16)
        w1t = w1t.astype(jnp.bfloat16)

    # Advisory cost estimate for XLA's scheduler (kernel-only HBM traffic).
    flops = 2 * B * (INPUT_SIZE * HIDDEN_SIZE + HIDDEN_SIZE * OUTPUT_SIZE)
    bytes_accessed = (B * INPUT_SIZE * xt.dtype.itemsize
                      + B * OUTPUT_SIZE * 4
                      + INPUT_SIZE * HIDDEN_SIZE * w1t.dtype.itemsize
                      + HIDDEN_SIZE * 4
                      + HIDDEN_SIZE * OUTPUT_SIZE * 4 + 4)

    # Raise the scoped-VMEM limit only when the requested tile needs it
    # (16 MiB is the most conservative scoped default, on v5e); stay under
    # v7x's 64 MiB physical VMEM per TensorCore.
    vmem_need = 128 * tile_b + (2 << 20)
    vmem_limit = min(vmem_need, 60 * 1024 * 1024) if vmem_need > (16 << 20) else None
    compiler_params = pltpu.CompilerParams(
        dimension_semantics=("parallel",),
        vmem_limit_bytes=vmem_limit)

    out_t = pl.pallas_call(
        mlp_kernel,
        out_shape=jax.ShapeDtypeStruct((OUTPUT_SIZE, B), jnp.float32),
        grid_spec=pltpu.PrefetchScalarGridSpec(
            num_scalar_prefetch=0,
            grid=grid,
            in_specs=[
                # x^T: tiled along the batch (lane) axis. A ragged last tile
                # (B % tile_b != 0) is handled by Pallas partial-block masking
                # (garbage columns never reach the output).
                # TODO(synk): add pipeline_mode=pl.Buffered(3) here if the DMA
                # ramp-up is still exposed on short grids at production B.
                pl.BlockSpec((INPUT_SIZE, tile_b), lambda i: (0, i)),
                # Weights / b1: constant index_map -> stay resident in VMEM.
                pl.BlockSpec((HIDDEN_SIZE, INPUT_SIZE), lambda i: (0, 0)),
                pl.BlockSpec((HIDDEN_SIZE, 1), lambda i: (0, 0)),
                pl.BlockSpec((OUTPUT_SIZE, HIDDEN_SIZE), lambda i: (0, 0)),
                # b2 scalar in SMEM.
                pl.BlockSpec(memory_space=pltpu.MemorySpace.SMEM),
            ],
            out_specs=pl.BlockSpec((OUTPUT_SIZE, tile_b), lambda i: (0, i)),
        ),
        compiler_params=compiler_params,
        cost_estimate=pl.CostEstimate(
            flops=flops, transcendentals=0, bytes_accessed=bytes_accessed),
    )(xt, w1t, b1c, w2t, b2s)

    # [1, B] -> [B, 1] is a pure reshape (OUTPUT_SIZE == 1), not a transpose.
    return out_t.reshape(B, OUTPUT_SIZE)


def init_params(key):
    # Deterministic init mimicking nn.Linear's uniform(-1/sqrt(fan_in), +),
    # stored in the natural "x @ W" layout ([in, out]); wrapper transposes.
    k1, k2, k3, k4 = jax.random.split(key, 4)
    lim1 = 1.0 / jnp.sqrt(INPUT_SIZE)
    lim2 = 1.0 / jnp.sqrt(HIDDEN_SIZE)
    w1 = jax.random.uniform(k1, (INPUT_SIZE, HIDDEN_SIZE), jnp.float32,
                            -lim1, lim1)
    b1 = jax.random.uniform(k2, (HIDDEN_SIZE,), jnp.float32, -lim1, lim1)
    w2 = jax.random.uniform(k3, (HIDDEN_SIZE, OUTPUT_SIZE), jnp.float32,
                            -lim2, lim2)
    b2 = jax.random.uniform(k4, (OUTPUT_SIZE,), jnp.float32, -lim2, lim2)
    return w1, b1, w2, b2


if __name__ == "__main__":
    key = jax.random.PRNGKey(0)
    kx, kp = jax.random.split(key)

    # Small but lane-friendly batch; the tile picker caps tile_b at 128 here,
    # giving grid=(2,) so the pipeline and the "parallel" axis are exercised.
    # (Tile-size / pipelining wins only show up at production-scale B under
    #  xprof wall-clock — don't tune from this config.)
    B = 256
    x = jax.random.normal(kx, (B, INPUT_SIZE), jnp.float32)
    w1, b1, w2, b2 = init_params(kp)

    out = neural_net_forward(x, w1, b1, w2, b2)
    out = jax.block_until_ready(out)

    # Reference check in plain JAX.
    ref = jnp.maximum(x @ w1 + b1, 0.0) @ w2 + b2
    assert out.shape == (B, OUTPUT_SIZE)
    assert jnp.allclose(out, ref, atol=1e-5, rtol=1e-5)

    print("KERNEL_OK")
</pallas_src>

<mosaic_0001>
module attributes {stable_mosaic.version = 11 : i64} {
  func.func @mlp_kernel(%arg0: i32, %arg1: memref<4x128xf32, #tpu.memory_space<vmem>>, %arg2: memref<64x4xf32, #tpu.memory_space<vmem>>, %arg3: memref<64x1xf32, #tpu.memory_space<vmem>>, %arg4: memref<1x64xf32, #tpu.memory_space<vmem>>, %arg5: memref<1x1xf32, #tpu.memory_space<smem>>, %arg6: memref<1x128xf32, #tpu.memory_space<vmem>>) attributes {dimension_semantics = [#tpu.dimension_semantics<parallel>], iteration_bounds = array<i64: 2>, scalar_prefetch = 0 : i64, scratch_operands = 0 : i64, tpu.core_type = #tpu.core_type<tc>, window_params = [{transform_indices = @transform_0, window_bounds = array<i64: 4, 128>}, {pipeline_mode = #tpu.pipeline_mode<synchronous>, transform_indices = @transform_1, window_bounds = array<i64: 64, 4>}, {pipeline_mode = #tpu.pipeline_mode<synchronous>, transform_indices = @transform_2, window_bounds = array<i64: 64, 1>}, {pipeline_mode = #tpu.pipeline_mode<synchronous>, transform_indices = @transform_3, window_bounds = array<i64: 1, 64>}, {transform_indices = @transform_4, window_bounds = array<i64: 1, 1>}, {transform_indices = @transform_5, window_bounds = array<i64: 1, 128>}]} {
    %c0 = arith.constant 0 : index
    %c0_0 = arith.constant 0 : index
    %0 = vector.load %arg2[%c0, %c0_0] : memref<64x4xf32, #tpu.memory_space<vmem>>, vector<64x4xf32>
    %c0_1 = arith.constant 0 : index
    %c0_2 = arith.constant 0 : index
    %1 = vector.load %arg1[%c0_1, %c0_2] : memref<4x128xf32, #tpu.memory_space<vmem>>, vector<4x128xf32>
    %cst = arith.constant dense<0.000000e+00> : vector<64x128xf32>
    %2 = tpu.matmul %0, %1, %cst {dimension_numbers = #tpu.dot_dimension_numbers<[1], [0], [0], [1], [0, 0, 1, 1], [], []>} : vector<64x4xf32>, vector<4x128xf32>, vector<64x128xf32> -> vector<64x128xf32>
    %c0_3 = arith.constant 0 : index
    %c0_4 = arith.constant 0 : index
    %3 = vector.load %arg3[%c0_3, %c0_4] : memref<64x1xf32, #tpu.memory_space<vmem>>, vector<64x1xf32>
    %4 = vector.broadcast %3 : vector<64x1xf32> to vector<64x128xf32>
    %5 = arith.addf %2, %4 : vector<64x128xf32>
    %cst_5 = arith.constant 0.000000e+00 : f32
    %6 = vector.broadcast %cst_5 : f32 to vector<64x128xf32>
    %7 = arith.maximumf %5, %6 : vector<64x128xf32>
    %c0_6 = arith.constant 0 : index
    %c0_7 = arith.constant 0 : index
    %8 = vector.load %arg4[%c0_6, %c0_7] : memref<1x64xf32, #tpu.memory_space<vmem>>, vector<1x64xf32>
    %cst_8 = arith.constant dense<0.000000e+00> : vector<1x128xf32>
    %9 = tpu.matmul %8, %7, %cst_8 {dimension_numbers = #tpu.dot_dimension_numbers<[1], [0], [0], [1], [0, 0, 1, 1], [], []>} : vector<1x64xf32>, vector<64x128xf32>, vector<1x128xf32> -> vector<1x128xf32>
    %c0_9 = arith.constant 0 : index
    %c0_10 = arith.constant 0 : index
    %10 = memref.load %arg5[%c0_9, %c0_10] : memref<1x1xf32, #tpu.memory_space<smem>>
    %11 = vector.broadcast %10 : f32 to vector<1x128xf32>
    %12 = arith.addf %9, %11 : vector<1x128xf32>
    %c0_11 = arith.constant 0 : index
    %c0_12 = arith.constant 0 : index
    %13 = vector.load %arg6[%c0_11, %c0_12] : memref<1x128xf32, #tpu.memory_space<vmem>>, vector<1x128xf32>
    tpu.vector_store %arg6[%c0_11, %c0_12], %12 {strides = array<i32>} : memref<1x128xf32, #tpu.memory_space<vmem>>, vector<1x128xf32>,
    return
  }
  func.func @transform_0(%arg0: i32) -> (i32, i32) {
    %c0_i32 = arith.constant 0 : i32
    %c0_i32_0 = arith.constant 0 : i32
    return %c0_i32, %arg0 : i32, i32
  }
  func.func @transform_1(%arg0: i32) -> (i32, i32) {
    %c0_i32 = arith.constant 0 : i32
    %c0_i32_0 = arith.constant 0 : i32
    %c0_i32_1 = arith.constant 0 : i32
    return %c0_i32, %c0_i32_0 : i32, i32
  }
  func.func @transform_2(%arg0: i32) -> (i32, i32) {
    %c0_i32 = arith.constant 0 : i32
    %c0_i32_0 = arith.constant 0 : i32
    %c0_i32_1 = arith.constant 0 : i32
    return %c0_i32, %c0_i32_0 : i32, i32
  }
  func.func @transform_3(%arg0: i32) -> (i32, i32) {
    %c0_i32 = arith.constant 0 : i32
    %c0_i32_0 = arith.constant 0 : i32
    %c0_i32_1 = arith.constant 0 : i32
    return %c0_i32, %c0_i32_0 : i32, i32
  }
  func.func @transform_4(%arg0: i32) -> (i32, i32) {
    %c0_i32 = arith.constant 0 : i32
    %c0_i32_0 = arith.constant 0 : i32
    %c0_i32_1 = arith.constant 0 : i32
    return %c0_i32, %c0_i32_0 : i32, i32
  }
  func.func @transform_5(%arg0: i32) -> (i32, i32) {
    %c0_i32 = arith.constant 0 : i32
    %c0_i32_0 = arith.constant 0 : i32
    return %c0_i32, %arg0 : i32, i32
  }
}

</mosaic_0001>

<llo_original>
// kernel: tpu_custom_call.1
$region0: #{tpu_custom_call.1}
  #allocation0 [shape = 'u32[]', space=smem, size = 0x4, offset = 0x4, fixed_abs, tag = 'smem constant byte address 0x4 - core index']
  #allocation1 [shape = 'u32[144,128]{1,0:T(1,128)}', space=vmem, size = 0x12000, scoped, tag = 'internal scratch']
  #allocation2 [shape = 'f32[1,1]{1,0:T(1,128)S(6)}', space=smem, size = 0x200, scoped, tag = 'scoped memory for tpu_custom_call.1']
  %s0 = inlined_call_operand.vmem [shape: f32[4,256], index: 0, kind: input, shape index: {}]
  %s1 = inlined_call_operand.vmem [shape: f32[64,4], index: 1, kind: input, shape index: {}]
  %s2 = inlined_call_operand.vmem [shape: f32[64,1], index: 2, kind: input, shape index: {}]
  %s3 = inlined_call_operand.vmem [shape: f32[1,64], index: 3, kind: input, shape index: {}]
  %s4 = inlined_call_operand.<no memory space> [shape: f32[1,1], index: 4, kind: input, shape index: {}]
  %s5 = inlined_call_operand.hbm [shape: f32[1,256], index: 5, kind: output, shape index: {}]
  %s6 = sld [smem:[#allocation0]]
  $region53: #{tpu_custom_call.1} parent=0
    _
  %s8 = ssub.s32 1, %s6
  %s9 = scalar_select 0, %s8, %s6
  %10 = sst [smem:[#allocation2]] %s4
  $region1: #{tpu_custom_call.1} parent=0
    #allocation3 [shape = 'u8[1024]{0}', space=vmem, size = 0x400, scoped, tag = 'output window, operand 0']
    #allocation4 [shape = 's32[2]{0}', space=sflag, size = 0x8, scoped, tag = 'scoped memory for tpu_custom_call.1']
    %11 = vsyncpa [#allocation4], 0
    %s12 = scalar_lea.sflag [#allocation4], 1
    %13 = vsyncpa %s12, 0
    loop: start=0, step=1, limit=4
    $region2: #{tpu_custom_call.1} parent=1 // loop_pre_header
      _
    $region3: #{tpu_custom_call.1} parent=1 // loop_header
      %s15 = sphi 0, %s19
      %p16 = scmp.ge.s32.totalorder %s15, 4
      %s25 = sphi 0, %s27
      %s28 = sphi 0, %s25
      %s29 = sphi 0, %s28
      %s45 = sphi 0, %s29
      %s49 = sphi 0, %s49
      %s51 = sphi 0, %s49
      %s52 = sphi 0, %s51
      %s66 = sphi 0, %s52
      %s70 = sphi 0, %s70
      %s72 = sphi 0, %s70
      %s73 = sphi 0, %s72
      %s87 = sphi 0, %s73
      %s91 = sphi 0, %s91
      %s93 = sphi 0, %s91
      %s94 = sphi 0, %s93
      %s108 = sphi 0, %s94
      %s112 = sphi 0, %s112
      %s114 = sphi 0, %s112
      %s115 = sphi 0, %s114
      %s129 = sphi 0, %s115
      %s135 = sphi 0, %s137
      %s138 = sphi 0, %s135
      %s139 = sphi 0, %s138
      %s155 = sphi 0, %s139
    $region4: #{tpu_custom_call.1} parent=1 // loop_header_branch
      %18 = sbr.rel (%p16) target = $region8
    $region5: #{tpu_custom_call.1} parent=1 // loop_body
      %s20 = ssub.s32 %s15, 1
      %s21 = ssub.s32 %s15, 2
      %s22 = sadd.s32 %s15, 1
      %s23 = ssub.s32 %s15, %s22
      %p24 = scmp.eq.s32.totalorder %s23, 0
      %s26 = sadd.s32 %s25, 1
      %s27 = scalar_select %p24, %s25, %s26
      %p30 = pneg %p24
      %p31 = scmp.eq.s32.totalorder %s15, 1
      %p32 = por %p30, %p31
      %p33 = scmp.ne.s32.totalorder %s25, %s28
      %p34 = scmp.eq.s32.totalorder %s15, 0
      %p35 = por %p33, %p34
      %p36 = scmp.ne.s32.totalorder %s25, %s28
      %p37 = scmp.eq.s32.totalorder %s20, 1
      %p38 = por %p36, %p37
      %p39 = scmp.ne.s32.totalorder %s28, %s29
      %p40 = scmp.eq.s32.totalorder %s20, 0
      %p41 = por %p39, %p40
      %p42 = scmp.ne.s32.totalorder %s28, %s29
      %p43 = scmp.eq.s32.totalorder %s21, 1
      %p44 = por %p42, %p43
      %p46 = scmp.ne.s32.totalorder %s29, %s45
      %p47 = scmp.eq.s32.totalorder %s21, 0
      %p48 = por %p46, %p47
      %s50 = sadd.s32 %s49, 1
      %p53 = scmp.eq.s32.totalorder %s15, 1
      %p54 = scmp.ne.s32.totalorder %s49, %s51
      %p55 = scmp.eq.s32.totalorder %s15, 0
      %p56 = por %p54, %p55
      %p57 = scmp.ne.s32.totalorder %s49, %s51
      %p58 = scmp.eq.s32.totalorder %s20, 1
      %p59 = por %p57, %p58
      %p60 = scmp.ne.s32.totalorder %s51, %s52
      %p61 = scmp.eq.s32.totalorder %s20, 0
      %p62 = por %p60, %p61
      %p63 = scmp.ne.s32.totalorder %s51, %s52
      %p64 = scmp.eq.s32.totalorder %s21, 1
      %p65 = por %p63, %p64
      %p67 = scmp.ne.s32.totalorder %s52, %s66
      %p68 = scmp.eq.s32.totalorder %s21, 0
      %p69 = por %p67, %p68
      %s71 = sadd.s32 %s70, 1
      %p74 = scmp.eq.s32.totalorder %s15, 1
      %p75 = scmp.ne.s32.totalorder %s70, %s72
      %p76 = scmp.eq.s32.totalorder %s15, 0
      %p77 = por %p75, %p76
      %p78 = scmp.ne.s32.totalorder %s70, %s72
      %p79 = scmp.eq.s32.totalorder %s20, 1
      %p80 = por %p78, %p79
      %p81 = scmp.ne.s32.totalorder %s72, %s73
      %p82 = scmp.eq.s32.totalorder %s20, 0
      %p83 = por %p81, %p82
      %p84 = scmp.ne.s32.totalorder %s72, %s73
      %p85 = scmp.eq.s32.totalorder %s21, 1
      %p86 = por %p84, %p85
      %p88 = scmp.ne.s32.totalorder %s73, %s87
      %p89 = scmp.eq.s32.totalorder %s21, 0
      %p90 = por %p88, %p89
      %s92 = sadd.s32 %s91, 1
      %p95 = scmp.eq.s32.totalorder %s15, 1
      %p96 = scmp.ne.s32.totalorder %s91, %s93
      %p97 = scmp.eq.s32.totalorder %s15, 0
      %p98 = por %p96, %p97
      %p99 = scmp.ne.s32.totalorder %s91, %s93
      %p100 = scmp.eq.s32.totalorder %s20, 1
      %p101 = por %p99, %p100
      %p102 = scmp.ne.s32.totalorder %s93, %s94
      %p103 = scmp.eq.s32.totalorder %s20, 0
      %p104 = por %p102, %p103
      %p105 = scmp.ne.s32.totalorder %s93, %s94
      %p106 = scmp.eq.s32.totalorder %s21, 1
      %p107 = por %p105, %p106
      %p109 = scmp.ne.s32.totalorder %s94, %s108
      %p110 = scmp.eq.s32.totalorder %s21, 0
      %p111 = por %p109, %p110
      %s113 = sadd.s32 %s112, 1
      %p116 = scmp.eq.s32.totalorder %s15, 1
      %p117 = scmp.ne.s32.totalorder %s112, %s114
      %p118 = scmp.eq.s32.totalorder %s15, 0
      %p119 = por %p117, %p118
      %p120 = scmp.ne.s32.totalorder %s112, %s114
      %p121 = scmp.eq.s32.totalorder %s20, 1
      %p122 = por %p120, %p121
      %p123 = scmp.ne.s32.totalorder %s114, %s115
      %p124 = scmp.eq.s32.totalorder %s20, 0
      %p125 = por %p123, %p124
      %p126 = scmp.ne.s32.totalorder %s114, %s115
      %p127 = scmp.eq.s32.totalorder %s21, 1
      %p128 = por %p126, %p127
      %p130 = scmp.ne.s32.totalorder %s115, %s129
      %p131 = scmp.eq.s32.totalorder %s21, 0
      %p132 = por %p130, %p131
      %s133 = ssub.s32 %s15, %s22
      %p134 = scmp.eq.s32.totalorder %s133, 0
      %s136 = sadd.s32 %s135, 1
      %s137 = scalar_select %p134, %s135, %s136
      %p140 = pneg %p134
      %p141 = scmp.eq.s32.totalorder %s15, 1
      %p142 = por %p140, %p141
      %p143 = scmp.ne.s32.totalorder %s135, %s138
      %p144 = scmp.eq.s32.totalorder %s15, 0
      %p145 = por %p143, %p144
      %p146 = scmp.ne.s32.totalorder %s135, %s138
      %p147 = scmp.eq.s32.totalorder %s20, 1
      %p148 = por %p146, %p147
      %p149 = scmp.ne.s32.totalorder %s138, %s139
      %p150 = scmp.eq.s32.totalorder %s20, 0
      %p151 = por %p149, %p150
      %p152 = scmp.ne.s32.totalorder %s138, %s139
      %p153 = scmp.eq.s32.totalorder %s21, 1
      %p154 = por %p152, %p153
      %p156 = scmp.ne.s32.totalorder %s139, %s155
      %p157 = scmp.eq.s32.totalorder %s21, 0
      %p158 = por %p156, %p157
      %p159 = scmp.le.s32.totalorder 1, %s15
      %p160 = scmp.lt.s32.totalorder %s15, 3
      %p161 = pnand %p159, %p160
      %p162 = pneg %p161
      // Predicated region
      $region9: #{tpu_custom_call.1} parent=5 // pred_check
        _
      $region10: #{tpu_custom_call.1} parent=5 // pred_check_branch
        %164 = sbr.rel (%p161) target = $region12
      $region11: #{tpu_custom_call.1} parent=5 // pred_region
        %s165 = ssub.s32 %s15, 1
        // Predicated region
        $region13: #{tpu_custom_call.1} parent=11 // pred_check
          %p166 = pneg %p62
        $region14: #{tpu_custom_call.1} parent=11 // pred_check_branch
          %168 = sbr.rel (%p166) target = $region16
        $region15: #{tpu_custom_call.1} parent=11 // pred_region
          _
        $region16: #{tpu_custom_call.1} parent=11 // pred_fallthru
          _
        // Predicated region
        $region17: #{tpu_custom_call.1} parent=11 // pred_check
          %p169 = pneg %p83
        $region18: #{tpu_custom_call.1} parent=11 // pred_check_branch
          %171 = sbr.rel (%p169) target = $region20
        $region19: #{tpu_custom_call.1} parent=11 // pred_region
          _
        $region20: #{tpu_custom_call.1} parent=11 // pred_fallthru
          _
        // Predicated region
        $region21: #{tpu_custom_call.1} parent=11 // pred_check
          %p172 = pneg %p104
        $region22: #{tpu_custom_call.1} parent=11 // pred_check_branch
          %174 = sbr.rel (%p172) target = $region24
        $region23: #{tpu_custom_call.1} parent=11 // pred_region
          _
        $region24: #{tpu_custom_call.1} parent=11 // pred_fallthru
          _
        // Predicated region
        $region25: #{tpu_custom_call.1} parent=11 // pred_check
          %p175 = pneg %p125
        $region26: #{tpu_custom_call.1} parent=11 // pred_check_branch
          %177 = sbr.rel (%p175) target = $region28
        $region27: #{tpu_custom_call.1} parent=11 // pred_region
          _
        $region28: #{tpu_custom_call.1} parent=11 // pred_fallthru
          _
      $region12: #{tpu_custom_call.1} parent=5 // pred_fallthru
        _
      %p178 = scmp.lt.s32.totalorder %s15, 2
      // Predicated region
      $region29: #{tpu_custom_call.1} parent=5 // pred_check
        %p179 = pneg %p178
      $region30: #{tpu_custom_call.1} parent=5 // pred_check_branch
        %181 = sbr.rel (%p179) target = $region32
      $region31: #{tpu_custom_call.1} parent=5 // pred_region
        // Predicated region
        $region33: #{tpu_custom_call.1} parent=31 // pred_check
          %p182 = pneg %p35
        $region34: #{tpu_custom_call.1} parent=31 // pred_check_branch
          %184 = sbr.rel (%p182) target = $region36
        $region35: #{tpu_custom_call.1} parent=31 // pred_region
          %p185 = scmp.lt.s32.totalorder %s15, 1
          %s186 = scalar_select %p185, %s15, 1
          %s187 = smul.addr %s186, 4
          %s188 = scalar_lea.vmem %s0, %s187
        $region36: #{tpu_custom_call.1} parent=31 // pred_fallthru
          _
      $region32: #{tpu_custom_call.1} parent=5 // pred_fallthru
        _
      %p189 = scmp.le.s32.totalorder 1, %s15
      %p190 = scmp.lt.s32.totalorder %s15, 3
      %p191 = pnand %p189, %p190
      %p192 = pneg %p191
      // Predicated region
      $region37: #{tpu_custom_call.1} parent=5 // pred_check
        _
      $region38: #{tpu_custom_call.1} parent=5 // pred_check_branch
        %194 = sbr.rel (%p191) target = $region40
      $region39: #{tpu_custom_call.1} parent=5 // pred_region
        %s195 = ssub.s32 %s15, 1
        %p196 = scmp.lt.s32.totalorder %s20, 1
        %s197 = scalar_select %p196, %s20, 1
        %s198 = smul.addr %s197, 4
        %s199 = scalar_lea.vmem %s0, %s198
        %p200 = pneg %p41
        %p201 = pneg %p38
        %p202 = pneg %p62
        %p203 = pneg %p59
        %p204 = pneg %p83
        %p205 = pneg %p80
        %p206 = pneg %p104
        %p207 = pneg %p101
        %p208 = pneg %p125
        %p209 = pneg %p122
        %p210 = pneg %p151
        %p211 = pneg %p148
        %s212 = sand.u32 %s138, 1
        %s213 = scalar_lea.sflag [#allocation4], %s212
        %s214 = sand.u32 %s138, 1
        %s215 = scalar_lea.vmem [#allocation3], %s214
        %p216 = scmp.lt.s32.totalorder %s20, 1
        %s217 = scalar_select %p216, %s20, 1
        %s218 = smul.addr %s217, 4
        %s219 = scalar_lea.vmem %s0, %s218
        %v220 = vld [vmem:[%s1] sm:$0xff]
        %v221 = vld [vmem:[%s1 + $0x8] sm:$0xff]
        %v222 = vld [vmem:[%s1 + $0x10] sm:$0xff]
        %v223 = vld [vmem:[%s1 + $0x18] sm:$0xff]
        %v224 = vld [vmem:[%s1 + $0x20] sm:$0xff]
        %v225 = vld [vmem:[%s1 + $0x28] sm:$0xff]
        %v226 = vld [vmem:[%s1 + $0x30] sm:$0xff]
        %v227 = vld [vmem:[%s1 + $0x38] sm:$0xff]
        %v228 = vld [vmem:[%s219] sm:$0xf]
        %v229 = vld [vmem:[%s2] sm:$0xff]
        %v230 = vld [vmem:[%s2 + $0x8] sm:$0xff]
        %v231 = vld [vmem:[%s2 + $0x10] sm:$0xff]
        %v232 = vld [vmem:[%s2 + $0x18] sm:$0xff]
        %v233 = vld [vmem:[%s2 + $0x20] sm:$0xff]
        %v234 = vld [vmem:[%s2 + $0x28] sm:$0xff]
        %v235 = vld [vmem:[%s2 + $0x30] sm:$0xff]
        %v236 = vld [vmem:[%s2 + $0x38] sm:$0xff]
        %238 = vset.pattern.permute.xlu0 0
        %239 = vperm.xlu0 %238, %v229
        %v240 = vpop.permute.xlu0 %239
        %243 = vset.pattern.permute.xlu0 0
        %244 = vperm.xlu0 %243, %v230
        %v245 = vpop.permute.xlu0 %244
        %248 = vset.pattern.permute.xlu0 0
        %249 = vperm.xlu0 %248, %v231
        %v250 = vpop.permute.xlu0 %249
        %253 = vset.pattern.permute.xlu0 0
        %254 = vperm.xlu0 %253, %v232
        %v255 = vpop.permute.xlu0 %254
        %258 = vset.pattern.permute.xlu0 0
        %259 = vperm.xlu0 %258, %v233
        %v260 = vpop.permute.xlu0 %259
        %263 = vset.pattern.permute.xlu0 0
        %264 = vperm.xlu0 %263, %v234
        %v265 = vpop.permute.xlu0 %264
        %268 = vset.pattern.permute.xlu0 0
        %269 = vperm.xlu0 %268, %v235
        %v270 = vpop.permute.xlu0 %269
        %273 = vset.pattern.permute.xlu0 0
        %274 = vperm.xlu0 %273, %v236
        %v275 = vpop.permute.xlu0 %274
        %vm277 = vcmask 31744
        %v279 = vsel %vm277, %v220, 0
        %v282 = vsel %vm277, %v221, 0
        %v285 = vsel %vm277, %v222, 0
        %v288 = vsel %vm277, %v223, 0
        %v291 = vsel %vm277, %v224, 0
        %v294 = vsel %vm277, %v225, 0
        %v297 = vsel %vm277, %v226, 0
        %v300 = vsel %vm277, %v227, 0
        %vm302 = vcmask 1043456
        %v304 = vsel %vm302, %v228, 0
        %306 = vmatprep.subr.mxu0 0.0
        %307 = vmatpush1.msra.mxu0 %v304
        %308 = vmatprep.subr.mxu0 0.0
        %309 = vmatpush1.msra.mxu0 0.0
        %310 = vmatprep.subr.mxu0 0.0
        %311 = vmatpush1.msra.mxu0 0.0
        %312 = vmatprep.subr.mxu0 0.0
        %313 = vmatpush1.msra.mxu0 0.0
        %314 = vmatprep.subr.mxu0 0.0
        %315 = vmatpush1.msra.mxu0 0.0
        %316 = vmatprep.subr.mxu0 0.0
        %317 = vmatpush1.msra.mxu0 0.0
        %318 = vmatprep.subr.mxu0 0.0
        %319 = vmatpush1.msra.mxu0 0.0
        %320 = vmatprep.subr.mxu0 0.0
        %321 = vmatpush1.msra.mxu0 0.0
        %322 = vmatprep.subr.mxu0 0.0
        %323 = vmatpush1.msra.mxu0 0.0
        %324 = vmatprep.subr.mxu0 0.0
        %325 = vmatpush1.msra.mxu0 0.0
        %326 = vmatprep.subr.mxu0 0.0
        %327 = vmatpush1.msra.mxu0 0.0
        %328 = vmatprep.subr.mxu0 0.0
        %329 = vmatpush1.msra.mxu0 0.0
        %330 = vmatprep.subr.mxu0 0.0
        %331 = vmatpush1.msra.mxu0 0.0
        %332 = vmatprep.subr.mxu0 0.0
        %333 = vmatpush1.msra.mxu0 0.0
        %334 = vmatprep.subr.mxu0 0.0
        %335 = vmatpush1.msra.mxu0 0.0
        %336 = vmatprep.subr.mxu0 0.0
        %337 = vmatpush1.msra.mxu0 0.0
        %338 = vmatprep.subr.mxu0 0.0
        %339 = vmatpush1.msra.mxu0 0.0
        %340 = vmatprep.subr.mxu0 0.0
        %341 = vmatpush1.msra.mxu0 0.0
        %342 = vmatprep.subr.mxu0 0.0
        %343 = vmatpush1.msra.mxu0 0.0
        %344 = vmatprep.subr.mxu0 0.0
        %345 = vmatpush1.msra.mxu0 0.0
        %346 = vmatprep.subr.mxu0 0.0
        %347 = vmatpush1.msra.mxu0 0.0
        %348 = vmatprep.subr.mxu0 0.0
        %349 = vmatpush1.msra.mxu0 0.0
        %350 = vmatprep.subr.mxu0 0.0
        %351 = vmatpush1.msra.mxu0 0.0
        %352 = vmatprep.subr.mxu0 0.0
        %353 = vmatpush1.msra.mxu0 0.0
        %354 = vmatprep.subr.mxu0 0.0
        %355 = vmatpush1.msra.mxu0 0.0
        %356 = vmatprep.subr.mxu0 0.0
        %357 = vmatpush1.msra.mxu0 0.0
        %358 = vmatprep.subr.mxu0 0.0
        %359 = vmatpush1.msra.mxu0 0.0
        %360 = vmatprep.subr.mxu0 0.0
        %361 = vmatpush1.msra.mxu0 0.0
        %362 = vmatprep.subr.mxu0 0.0
        %363 = vmatpush1.msra.mxu0 0.0
        %364 = vmatprep.subr.mxu0 0.0
        %365 = vmatpush1.msra.mxu0 0.0
        %366 = vmatprep.subr.mxu0 0.0
        %367 = vmatpush1.msra.mxu0 0.0
        %368 = vmatprep.subr.mxu0 0.0
        %369 = vmatpush1.msra.mxu0 0.0
        %370 = vmatprep.mubr.f32.mxu0 0.0
        %371 = vmatmul.mubr.f32.gmra.mrb[0].mxu0 %v279
        %v372 = vpop.f32.mrb[0].mxu0
        %v373 = vadd.f32 %v240, %v372
        %v374 = vpop.f32.mrb[0].mxu0
        %375 = vmatprep.mubr.f32.mxu0 0.0
        %376 = vmatmul.mubr.f32.gmra.mrb[0].mxu0 %v282
        %v377 = vpop.f32.mrb[0].mxu0
        %v378 = vadd.f32 %v245, %v377
        %v379 = vpop.f32.mrb[0].mxu0
        %380 = vmatprep.mubr.f32.mxu0 0.0
        %381 = vmatmul.mubr.f32.gmra.mrb[0].mxu0 %v285
        %v382 = vpop.f32.mrb[0].mxu0
        %v383 = vadd.f32 %v250, %v382
        %v384 = vpop.f32.mrb[0].mxu0
        %385 = vmatprep.mubr.f32.mxu0 0.0
        %386 = vmatmul.mubr.f32.gmra.mrb[0].mxu0 %v288
        %v387 = vpop.f32.mrb[0].mxu0
        %v388 = vadd.f32 %v255, %v387
        %v389 = vpop.f32.mrb[0].mxu0
        %390 = vmatprep.mubr.f32.mxu0 0.0
        %391 = vmatmul.mubr.f32.gmra.mrb[0].mxu0 %v291
        %v392 = vpop.f32.mrb[0].mxu0
        %v393 = vadd.f32 %v260, %v392
        %v394 = vpop.f32.mrb[0].mxu0
        %395 = vmatprep.mubr.f32.mxu0 0.0
        %396 = vmatmul.mubr.f32.gmra.mrb[0].mxu0 %v294
        %v397 = vpop.f32.mrb[0].mxu0
        %v398 = vadd.f32 %v265, %v397
        %v399 = vpop.f32.mrb[0].mxu0
        %400 = vmatprep.mubr.f32.mxu0 0.0
        %401 = vmatmul.mubr.f32.gmra.mrb[0].mxu0 %v297
        %v402 = vpop.f32.mrb[0].mxu0
        %v403 = vadd.f32 %v270, %v402
        %v404 = vpop.f32.mrb[0].mxu0
        %405 = vmatprep.mubr.f32.mxu0 0.0
        %406 = vmatmul.mubr.f32.gmra.mrb[0].mxu0 %v300
        %v407 = vpop.f32.mrb[0].mxu0
        %v408 = vadd.f32 %v275, %v407
        %v409 = vpop.f32.mrb[0].mxu0
        %410 = vdwg.mxu0
        %v411 = vmax.f32 %v373, 0.0
        %v412 = vmax.f32 %v378, 0.0
        %v413 = vmax.f32 %v383, 0.0
        %v414 = vmax.f32 %v388, 0.0
        %v415 = vmax.f32 %v393, 0.0
        %v416 = vmax.f32 %v398, 0.0
        %v417 = vmax.f32 %v403, 0.0
        %v418 = vmax.f32 %v408, 0.0
        %v419 = vld [vmem:[%s3] sm:$0x1]
        %s420 = sld [smem:[#allocation2]]
        %v421 = vstv %s420
        %vm422 = vcmask 523264
        %v424 = vsel %vm422, %v419, 0
        %426 = vmatprep.subr.mxu0 0.0
        %427 = vmatpush1.msra.mxu0 %v411
        %428 = vmatprep.subr.mxu0 0.0
        %429 = vmatpush1.msra.mxu0 %v412
        %430 = vmatprep.subr.mxu0 0.0
        %431 = vmatpush1.msra.mxu0 %v413
        %432 = vmatprep.subr.mxu0 0.0
        %433 = vmatpush1.msra.mxu0 %v414
        %434 = vmatprep.subr.mxu0 0.0
        %435 = vmatpush1.msra.mxu0 %v415
        %436 = vmatprep.subr.mxu0 0.0
        %437 = vmatpush1.msra.mxu0 %v416
        %438 = vmatprep.subr.mxu0 0.0
        %439 = vmatpush1.msra.mxu0 %v417
        %440 = vmatprep.subr.mxu0 0.0
        %441 = vmatpush1.msra.mxu0 %v418
        %442 = vmatprep.subr.mxu0 0.0
        %443 = vmatpush1.msra.mxu0 0.0
        %444 = vmatprep.subr.mxu0 0.0
        %445 = vmatpush1.msra.mxu0 0.0
        %446 = vmatprep.subr.mxu0 0.0
        %447 = vmatpush1.msra.mxu0 0.0
        %448 = vmatprep.subr.mxu0 0.0
        %449 = vmatpush1.msra.mxu0 0.0
        %450 = vmatprep.subr.mxu0 0.0
        %451 = vmatpush1.msra.mxu0 0.0
        %452 = vmatprep.subr.mxu0 0.0
        %453 = vmatpush1.msra.mxu0 0.0
        %454 = vmatprep.subr.mxu0 0.0
        %455 = vmatpush1.msra.mxu0 0.0
        %456 = vmatprep.subr.mxu0 0.0
        %457 = vmatpush1.msra.mxu0 0.0
        %458 = vmatprep.subr.mxu0 0.0
        %459 = vmatpush1.msra.mxu0 0.0
        %460 = vmatprep.subr.mxu0 0.0
        %461 = vmatpush1.msra.mxu0 0.0
        %462 = vmatprep.subr.mxu0 0.0
        %463 = vmatpush1.msra.mxu0 0.0
        %464 = vmatprep.subr.mxu0 0.0
        %465 = vmatpush1.msra.mxu0 0.0
        %466 = vmatprep.subr.mxu0 0.0
        %467 = vmatpush1.msra.mxu0 0.0
        %468 = vmatprep.subr.mxu0 0.0
        %469 = vmatpush1.msra.mxu0 0.0
        %470 = vmatprep.subr.mxu0 0.0
        %471 = vmatpush1.msra.mxu0 0.0
        %472 = vmatprep.subr.mxu0 0.0
        %473 = vmatpush1.msra.mxu0 0.0
        %474 = vmatprep.subr.mxu0 0.0
        %475 = vmatpush1.msra.mxu0 0.0
        %476 = vmatprep.subr.mxu0 0.0
        %477 = vmatpush1.msra.mxu0 0.0
        %478 = vmatprep.subr.mxu0 0.0
        %479 = vmatpush1.msra.mxu0 0.0
        %480 = vmatprep.subr.mxu0 0.0
        %481 = vmatpush1.msra.mxu0 0.0
        %482 = vmatprep.subr.mxu0 0.0
        %483 = vmatpush1.msra.mxu0 0.0
        %484 = vmatprep.subr.mxu0 0.0
        %485 = vmatpush1.msra.mxu0 0.0
        %486 = vmatprep.subr.mxu0 0.0
        %487 = vmatpush1.msra.mxu0 0.0
        %488 = vmatprep.subr.mxu0 0.0
        %489 = vmatpush1.msra.mxu0 0.0
        %490 = vmatprep.mubr.f32.mxu0 0.0
        %491 = vmatmul.mubr.f32.gmra.mrb[0].mxu0 %v424
        %v492 = vpop.f32.mrb[0].mxu0
        %v493 = vadd.f32 %v421, %v492
        %v494 = vpop.f32.mrb[0].mxu0
        %495 = vdwg.mxu0
        %496 = vst [vmem:[%s215] sm:$0x1] %v493
        %s497 = sand.u32 %s138, 1
        %s498 = scalar_lea.sflag [#allocation4], %s497
        %s499 = sand.u32 %s138, 1
        %s500 = scalar_lea.vmem [#allocation3], %s499
        // Predicated region
        $region41: #{tpu_custom_call.1} parent=39 // pred_check
          %p501 = pneg %p148
        $region42: #{tpu_custom_call.1} parent=39 // pred_check_branch
          %503 = sbr.rel (%p501) target = $region44
        $region43: #{tpu_custom_call.1} parent=39 // pred_region
          %s505 = ssub.s32 16, 16
          %506 = vsyncadd %s498, %s505
          %s507 = smul.addr %s20, 16
          %s508 = scalar_lea.hbm %s5, %s507
          %s510 = sshll.u32 %s500, 4
          %s511 = int_to_ptr.vmem [resolvable:$true] %s510
          %513 = dma.vmem_to_hbm [thread:$0]  %s511, 16, %s508, %s498
        $region44: #{tpu_custom_call.1} parent=39 // pred_fallthru
          _
      $region40: #{tpu_custom_call.1} parent=5 // pred_fallthru
        _
      %p514 = scmp.le.s32.totalorder 2, %s15
      // Predicated region
      $region45: #{tpu_custom_call.1} parent=5 // pred_check
        %p515 = pneg %p514
      $region46: #{tpu_custom_call.1} parent=5 // pred_check_branch
        %517 = sbr.rel (%p515) target = $region48
      $region47: #{tpu_custom_call.1} parent=5 // pred_region
        %s518 = ssub.s32 %s15, 2
        // Predicated region
        $region49: #{tpu_custom_call.1} parent=47 // pred_check
          %p519 = pneg %p154
        $region50: #{tpu_custom_call.1} parent=47 // pred_check_branch
          %521 = sbr.rel (%p519) target = $region52
        $region51: #{tpu_custom_call.1} parent=47 // pred_region
          %s522 = sand.u32 %s139, 1
          %s523 = scalar_lea.sflag [#allocation4], %s522
          %s524 = sand.u32 %s139, 1
          %s525 = scalar_lea.vmem [#allocation3], %s524
          %526 = dma.done %s523, 16
        $region52: #{tpu_custom_call.1} parent=47 // pred_fallthru
          _
      $region48: #{tpu_custom_call.1} parent=5 // pred_fallthru
        _
    $region6: #{tpu_custom_call.1} parent=1 // loop_footer
      %s19 = sadd.s32 1, %s15
    $region7: #{tpu_custom_call.1} parent=1 // loop_footer_branch
      %14 = sbr.rel target = $region3
    $region8: #{tpu_custom_call.1} parent=1 // loop_exit
      _
    %527 = vsyncpa [#allocation4], 1
    %s528 = scalar_lea.sflag [#allocation4], 1
    %529 = vsyncpa %s528, 1

</llo_original>
